<compile_context>
chip_gen: v7x
topology: tpu7x:2x2x1
jax: 0.10.0
libtpu: 0.0.40
codegen_flags: <defaults>
</compile_context>

<pallas_src>
import functools

import jax
import jax.numpy as jnp
from jax.experimental import pallas as pl
from jax.experimental.pallas import tpu as pltpu

LANES = 128
MAX_TILE_ROWS = 1024  # 1024 x 128 f32 = 512 KiB per input tile


def _tversky_partial_kernel(x_ref, t_ref, out_ref, *, rows_valid, tile_rows,
                            needs_mask):
    """Writes per-tile (8,128) partial sums of x*t, x, t into out_ref[0, 0..2]."""
    x = x_ref[...].astype(jnp.float32)
    t = t_ref[...].astype(jnp.float32)

    if needs_mask:
        # The last tile may read rows past the real data (unspecified values);
        # zero them out.  Padding inside a valid row is already zero.
        i = pl.program_id(0)
        row = jax.lax.broadcasted_iota(jnp.int32, (tile_rows, LANES), 0)
        valid = (i * tile_rows + row) < rows_valid
        x = jnp.where(valid, x, 0.0)
        t = jnp.where(valid, t, 0.0)

    xt = x * t

    def fold(v):
        # (tile_rows, 128) -> (tile_rows//8, 8, 128) -> sum over leading axis.
        # Pure vector adds across vregs; no cross-lane reduction per step.
        return jnp.sum(v.reshape(tile_rows // 8, 8, LANES), axis=0)

    out_ref[0, 0] = fold(xt)
    out_ref[0, 1] = fold(x)
    out_ref[0, 2] = fold(t)


def tversky_loss(inputs, targets, alpha=0.5, beta=0.5, smooth=1.0):
    """JAX/Pallas equivalent of TverskyLoss.forward (returns a scalar f32)."""
    x = jnp.reshape(inputs, (-1,))   # metadata-only, keeps original dtype
    t = jnp.reshape(targets, (-1,))
    n = x.shape[0]

    # Pad only to a lane (128) multiple; for typical image sizes this is a no-op.
    rows = -(-n // LANES)
    padded = rows * LANES
    if padded != n:
        x = jnp.pad(x, (0, padded - n))
        t = jnp.pad(t, (0, padded - n))

    x2 = x.reshape(rows, LANES)
    t2 = t.reshape(rows, LANES)

    # Largest multiple-of-8 row tile up to MAX_TILE_ROWS.
    tile_rows = min(MAX_TILE_ROWS, ((rows + 7) // 8) * 8)
    num_tiles = -(-rows // tile_rows)
    needs_mask = (num_tiles * tile_rows) != rows

    kernel = functools.partial(
        _tversky_partial_kernel,
        rows_valid=rows,
        tile_rows=tile_rows,
        needs_mask=needs_mask,
    )

    partials = pl.pallas_call(
        kernel,
        out_shape=jax.ShapeDtypeStruct((num_tiles, 3, 8, LANES), jnp.float32),
        grid_spec=pltpu.PrefetchScalarGridSpec(
            num_scalar_prefetch=0,
            grid=(num_tiles,),
            in_specs=[
                pl.BlockSpec((tile_rows, LANES), lambda i: (i, 0)),
                pl.BlockSpec((tile_rows, LANES), lambda i: (i, 0)),
            ],
            out_specs=pl.BlockSpec((1, 3, 8, LANES), lambda i: (i, 0, 0, 0)),
        ),
        compiler_params=pltpu.CompilerParams(
            dimension_semantics=("parallel",),
        ),
    )(x2, t2)

    # Tiny cross-tile reduction + scalar Tversky ratio (negligible work).
    s = jnp.sum(partials, axis=(0, 2, 3))  # [sum(x*t), sum(x), sum(t)]
    tp = s[0]
    fp = s[1] - s[0]   # sum((1 - t) * x) = sum(x) - sum(x*t)
    fn = s[2] - s[0]   # sum(t * (1 - x)) = sum(t) - sum(x*t)
    tversky = (tp + smooth) / (tp + alpha * fp + beta * fn + smooth)
    return (1.0 - tversky).astype(jnp.float32)


def tversky_loss_ref(inputs, targets, alpha=0.5, beta=0.5, smooth=1.0):
    x = jnp.reshape(inputs, (-1,)).astype(jnp.float32)
    t = jnp.reshape(targets, (-1,)).astype(jnp.float32)
    tp = jnp.sum(x * t)
    fp = jnp.sum((1.0 - t) * x)
    fn = jnp.sum(t * (1.0 - x))
    return 1.0 - (tp + smooth) / (tp + alpha * fp + beta * fn + smooth)


if __name__ == "__main__":
    key = jax.random.PRNGKey(0)
    k1, k2 = jax.random.split(key)

    # NCHW like the PyTorch usage: predicted probabilities & binary targets.
    B, C, H, W = 2, 4, 16, 16
    inputs = jax.nn.sigmoid(jax.random.normal(k1, (B, C, H, W), dtype=jnp.float32))
    targets = (jax.random.uniform(k2, (B, C, H, W)) > 0.5).astype(jnp.float32)

    loss = tversky_loss(inputs, targets, alpha=0.5, beta=0.5, smooth=1.0)
    loss = jax.block_until_ready(loss)

    ref = tversky_loss_ref(inputs, targets, alpha=0.5, beta=0.5, smooth=1.0)
    assert jnp.allclose(loss, ref, rtol=1e-5, atol=1e-6), (loss, ref)

    # Ragged / non-tile-multiple size to exercise the in-kernel mask path.
    n2 = 3 * 5 * 17 * 13  # not a multiple of 128
    x2 = jax.nn.sigmoid(jax.random.normal(k1, (n2,), dtype=jnp.float32))
    t2 = (jax.random.uniform(k2, (n2,)) > 0.5).astype(jnp.float32)
    loss2 = jax.block_until_ready(tversky_loss(x2, t2))
    ref2 = tversky_loss_ref(x2, t2)
    assert jnp.allclose(loss2, ref2, rtol=1e-5, atol=1e-6), (loss2, ref2)

    print("KERNEL_OK")
</pallas_src>

<mosaic_0001>
module attributes {stable_mosaic.version = 11 : i64} {
  func.func @_tversky_partial_kernel(%arg0: i32, %arg1: memref<16x128xf32, #tpu.memory_space<vmem>>, %arg2: memref<16x128xf32, #tpu.memory_space<vmem>>, %arg3: memref<1x3x8x128xf32, #tpu.memory_space<vmem>>) attributes {dimension_semantics = [#tpu.dimension_semantics<parallel>], iteration_bounds = array<i64: 1>, scalar_prefetch = 0 : i64, scratch_operands = 0 : i64, tpu.core_type = #tpu.core_type<tc>, window_params = [{transform_indices = @transform_0, window_bounds = array<i64: 16, 128>}, {transform_indices = @transform_1, window_bounds = array<i64: 16, 128>}, {transform_indices = @transform_2, window_bounds = array<i64: 1, 3, 8, 128>}]} {
    %c0 = arith.constant 0 : index
    %c0_0 = arith.constant 0 : index
    %0 = vector.load %arg1[%c0, %c0_0] : memref<16x128xf32, #tpu.memory_space<vmem>>, vector<16x128xf32>
    %c0_1 = arith.constant 0 : index
    %c0_2 = arith.constant 0 : index
    %1 = vector.load %arg2[%c0_1, %c0_2] : memref<16x128xf32, #tpu.memory_space<vmem>>, vector<16x128xf32>
    %2 = arith.mulf %0, %1 : vector<16x128xf32>
    %3 = vector.shape_cast %2 : vector<16x128xf32> to vector<2x8x128xf32>
    %cst = arith.constant dense<0.000000e+00> : vector<8x128xf32>
    %4 = vector.multi_reduction <add>, %3, %cst [0] : vector<2x8x128xf32> to vector<8x128xf32>
    %c0_3 = arith.constant 0 : index
    %c0_4 = arith.constant 0 : index
    %c0_5 = arith.constant 0 : index
    %c0_6 = arith.constant 0 : index
    %5 = vector.load %arg3[%c0_3, %c0_4, %c0_5, %c0_6] : memref<1x3x8x128xf32, #tpu.memory_space<vmem>>, vector<1x1x8x128xf32>
    %6 = vector.shape_cast %5 : vector<1x1x8x128xf32> to vector<8x128xf32>
    %7 = vector.shape_cast %4 : vector<8x128xf32> to vector<1x1x8x128xf32>
    tpu.vector_store %arg3[%c0_3, %c0_4, %c0_5, %c0_6], %7 {strides = array<i32>} : memref<1x3x8x128xf32, #tpu.memory_space<vmem>>, vector<1x1x8x128xf32>,
    %8 = vector.shape_cast %0 : vector<16x128xf32> to vector<2x8x128xf32>
    %cst_7 = arith.constant dense<0.000000e+00> : vector<8x128xf32>
    %9 = vector.multi_reduction <add>, %8, %cst_7 [0] : vector<2x8x128xf32> to vector<8x128xf32>
    %c0_8 = arith.constant 0 : index
    %c1 = arith.constant 1 : index
    %c0_9 = arith.constant 0 : index
    %c0_10 = arith.constant 0 : index
    %10 = vector.load %arg3[%c0_8, %c1, %c0_9, %c0_10] : memref<1x3x8x128xf32, #tpu.memory_space<vmem>>, vector<1x1x8x128xf32>
    %11 = vector.shape_cast %10 : vector<1x1x8x128xf32> to vector<8x128xf32>
    %12 = vector.shape_cast %9 : vector<8x128xf32> to vector<1x1x8x128xf32>
    tpu.vector_store %arg3[%c0_8, %c1, %c0_9, %c0_10], %12 {strides = array<i32>} : memref<1x3x8x128xf32, #tpu.memory_space<vmem>>, vector<1x1x8x128xf32>,
    %13 = vector.shape_cast %1 : vector<16x128xf32> to vector<2x8x128xf32>
    %cst_11 = arith.constant dense<0.000000e+00> : vector<8x128xf32>
    %14 = vector.multi_reduction <add>, %13, %cst_11 [0] : vector<2x8x128xf32> to vector<8x128xf32>
    %c0_12 = arith.constant 0 : index
    %c2 = arith.constant 2 : index
    %c0_13 = arith.constant 0 : index
    %c0_14 = arith.constant 0 : index
    %15 = vector.load %arg3[%c0_12, %c2, %c0_13, %c0_14] : memref<1x3x8x128xf32, #tpu.memory_space<vmem>>, vector<1x1x8x128xf32>
    %16 = vector.shape_cast %15 : vector<1x1x8x128xf32> to vector<8x128xf32>
    %17 = vector.shape_cast %14 : vector<8x128xf32> to vector<1x1x8x128xf32>
    tpu.vector_store %arg3[%c0_12, %c2, %c0_13, %c0_14], %17 {strides = array<i32>} : memref<1x3x8x128xf32, #tpu.memory_space<vmem>>, vector<1x1x8x128xf32>,
    return
  }
  func.func @transform_0(%arg0: i32) -> (i32, i32) {
    %c0_i32 = arith.constant 0 : i32
    %c0_i32_0 = arith.constant 0 : i32
    return %arg0, %c0_i32 : i32, i32
  }
  func.func @transform_1(%arg0: i32) -> (i32, i32) {
    %c0_i32 = arith.constant 0 : i32
    %c0_i32_0 = arith.constant 0 : i32
    return %arg0, %c0_i32 : i32, i32
  }
  func.func @transform_2(%arg0: i32) -> (i32, i32, i32, i32) {
    %c0_i32 = arith.constant 0 : i32
    %c0_i32_0 = arith.constant 0 : i32
    %c0_i32_1 = arith.constant 0 : i32
    %c0_i32_2 = arith.constant 0 : i32
    return %arg0, %c0_i32, %c0_i32_0, %c0_i32_1 : i32, i32, i32, i32
  }
}

</mosaic_0001>

<llo_original>
// kernel: tpu_custom_call.1
$region0: #{tpu_custom_call.1}
  #allocation0 [shape = 'u32[]', space=smem, size = 0x4, offset = 0x4, fixed_abs, tag = 'smem constant byte address 0x4 - core index']
  #allocation1 [shape = 'u32[144,128]{1,0:T(1,128)}', space=vmem, size = 0x12000, scoped, tag = 'internal scratch']
  %s0 = inlined_call_operand.hbm [shape: f32[16,128], index: 0, kind: input, shape index: {}]
  %s1 = inlined_call_operand.hbm [shape: f32[16,128], index: 1, kind: input, shape index: {}]
  %s2 = inlined_call_operand.hbm [shape: f32[1,3,8,128], index: 2, kind: output, shape index: {}]
  %s3 = sld [smem:[#allocation0]]
  $region26: #{tpu_custom_call.1} parent=0
    _
  %s5 = ssub.s32 1, %s3
  %s6 = scalar_select 0, %s5, %s3
  $region1: #{tpu_custom_call.1} parent=0
    #allocation2 [shape = 'u8[8192]{0}', space=vmem, size = 0x2000, scoped, tag = 'input window, operand 0, single buffered']
    #allocation3 [shape = 's32[1]{0}', space=sflag, size = 0x4, scoped, tag = 'scoped memory for tpu_custom_call.1']
    #allocation4 [shape = 's32[1]{0}', space=sflag, size = 0x4, scoped, tag = 'scoped memory for tpu_custom_call.1']
    #allocation5 [shape = 'u8[8192]{0}', space=vmem, size = 0x2000, scoped, tag = 'input window, operand 1, single buffered']
    #allocation6 [shape = 's32[1]{0}', space=sflag, size = 0x4, scoped, tag = 'scoped memory for tpu_custom_call.1']
    #allocation7 [shape = 'u8[12288]{0}', space=vmem, size = 0x3000, scoped, tag = 'output window, operand 0, single buffered']
    %7 = vsyncpa [#allocation3], 0
    %8 = vsyncpa [#allocation6], 0
    %9 = vsyncpa [#allocation4], 0
    // Predicated region
    $region2: #{tpu_custom_call.1} parent=1 // pred_check
      _
    $region3: #{tpu_custom_call.1} parent=1 // pred_check_branch
      %11 = sbr.rel (0) target = $region5
    $region4: #{tpu_custom_call.1} parent=1 // pred_region
      %s13 = ssub.s32 256, 256
      %14 = vsyncadd [#allocation3], %s13
      %s15 = sshll.u32 [#allocation2], 4
      %s16 = int_to_ptr.vmem [resolvable:$true] %s15
      %21 = dma.hbm_to_vmem [thread:$0]  %s0, 256, %s16, [#allocation3], 128, 128, 8
    $region5: #{tpu_custom_call.1} parent=1 // pred_fallthru
      _
    // Predicated region
    $region6: #{tpu_custom_call.1} parent=1 // pred_check
      _
    $region7: #{tpu_custom_call.1} parent=1 // pred_check_branch
      %23 = sbr.rel (0) target = $region9
    $region8: #{tpu_custom_call.1} parent=1 // pred_region
      %s25 = ssub.s32 256, 256
      %26 = vsyncadd [#allocation6], %s25
      %s27 = sshll.u32 [#allocation5], 4
      %s28 = int_to_ptr.vmem [resolvable:$true] %s27
      %33 = dma.hbm_to_vmem [thread:$0]  %s1, 256, %s28, [#allocation6], 128, 128, 8
    $region9: #{tpu_custom_call.1} parent=1 // pred_fallthru
      _
    // Predicated region
    $region10: #{tpu_custom_call.1} parent=1 // pred_check
      _
    $region11: #{tpu_custom_call.1} parent=1 // pred_check_branch
      %35 = sbr.rel (0) target = $region13
    $region12: #{tpu_custom_call.1} parent=1 // pred_region
      %36 = dma.done [#allocation3], 256
    $region13: #{tpu_custom_call.1} parent=1 // pred_fallthru
      _
    // Predicated region
    $region14: #{tpu_custom_call.1} parent=1 // pred_check
      _
    $region15: #{tpu_custom_call.1} parent=1 // pred_check_branch
      %38 = sbr.rel (0) target = $region17
    $region16: #{tpu_custom_call.1} parent=1 // pred_region
      %39 = dma.done [#allocation6], 256
    $region17: #{tpu_custom_call.1} parent=1 // pred_fallthru
      _
    %v40 = vld [vmem:[#allocation2] sm:$0xff]
    %v41 = vld [vmem:[#allocation2 + $0x8] sm:$0xff]
    %v42 = vld [vmem:[#allocation5] sm:$0xff]
    %v43 = vld [vmem:[#allocation5 + $0x8] sm:$0xff]
    %v44 = vmul.f32 %v40, %v42
    %v45 = vmul.f32 %v41, %v43
    %v46 = vadd.f32 %v44, %v45
    %47 = vst [vmem:[#allocation7] sm:$0xff] %v46
    %v48 = vadd.f32 %v40, %v41
    %s49 = scalar_lea.vmem [#allocation7], 8
    %50 = vst [vmem:[%s49] sm:$0xff] %v48
    %v51 = vadd.f32 %v42, %v43
    %s52 = scalar_lea.vmem [#allocation7], 16
    %53 = vst [vmem:[%s52] sm:$0xff] %v51
    // Predicated region
    $region18: #{tpu_custom_call.1} parent=1 // pred_check
      _
    $region19: #{tpu_custom_call.1} parent=1 // pred_check_branch
      %55 = sbr.rel (0) target = $region21
    $region20: #{tpu_custom_call.1} parent=1 // pred_region
      %s57 = ssub.s32 384, 384
      %58 = vsyncadd [#allocation4], %s57
      %s59 = sshll.u32 [#allocation7], 4
      %s60 = int_to_ptr.vmem [resolvable:$true] %s59
      %65 = dma.vmem_to_hbm [thread:$0]  %s60, 384, %s2, [#allocation4], 128, 128, 8
    $region21: #{tpu_custom_call.1} parent=1 // pred_fallthru
      _
    // Predicated region
    $region22: #{tpu_custom_call.1} parent=1 // pred_check
      _
    $region23: #{tpu_custom_call.1} parent=1 // pred_check_branch
      %67 = sbr.rel (0) target = $region25
    $region24: #{tpu_custom_call.1} parent=1 // pred_region
      %68 = dma.done [#allocation4], 384
    $region25: #{tpu_custom_call.1} parent=1 // pred_fallthru
      _
    %69 = vsyncpa [#allocation3], 1
    %70 = vsyncpa [#allocation6], 1
    %71 = vsyncpa [#allocation4], 1

</llo_original>
